<compile_context>
chip_gen: v5e
topology: v5e:2x2
jax: 0.10.0
libtpu: 0.0.40
codegen_flags: <defaults>
</compile_context>

<pallas_src>
import functools

import jax
import jax.numpy as jnp
from jax import lax
from jax.experimental import pallas as pl
from jax.experimental.pallas import tpu as pltpu

EPS = 1e-6
_EPS2 = EPS * EPS
_LANE = 128
_UNROLL_ALL_C = 32      # fully unroll the channel loop up to this C
_CHANNEL_UNROLL = 4     # fori_loop unroll factor beyond that


def _vmem_phys_bytes():
    """Per-core VMEM capacity; conservative 64 MiB (v7x) if the query fails."""
    try:
        info = pltpu.get_tpu_info()
        v = getattr(info, "vmem_capacity_bytes", None)
        if v:
            return max(int(v), 16 * 1024 * 1024)
    except Exception:
        pass
    return 64 * 1024 * 1024


def _pick_sub_rows(r_tile, max_sub):
    # Row sub-chunk size whose three f32 accumulators stay register-resident.
    for s in (64, 32, 16, 8):
        if s <= max_sub and r_tile % s == 0:
            return s
    return min(r_tile, max_sub)


def _channel_sums(x1v, x2v, C, rows, unroll):
    """Accumulate dot / |x1|^2 / |x2|^2 over channels for one row sub-chunk.

    x1v/x2v are channel-leading (C, rows, 128) ref views; the accumulators are
    (rows, 128) f32 (rows <= 64, i.e. <= 8 vregs each)."""
    zero = jnp.zeros((rows, _LANE), jnp.float32)
    if C <= _UNROLL_ALL_C:
        dot, n1, n2 = zero, zero, zero
        for c in range(C):          # fully unrolled at trace time
            a = x1v[c].astype(jnp.float32)
            b = x2v[c].astype(jnp.float32)
            dot = dot + a * b
            n1 = n1 + a * a
            n2 = n2 + b * b
        return dot, n1, n2

    def body(c, carry):
        dot, n1, n2 = carry
        a = x1v[c].astype(jnp.float32)
        b = x2v[c].astype(jnp.float32)
        return dot + a * b, n1 + a * a, n2 + b * b

    return lax.fori_loop(0, C, body, (zero, zero, zero), unroll=unroll)


def _tiled_kernel(x1_ref, x2_ref, out_ref, *, C, r_tile, r_valid_last,
                  sub_rows, unroll):
    # x1_ref/x2_ref: (C, r_tile, 128); out_ref: (1, 128) per-sample partial.
    r = pl.program_id(1)
    last_r = pl.num_programs(1) - 1

    @pl.when(r == 0)
    def _init():
        out_ref[...] = jnp.zeros_like(out_ref)

    def accumulate(valid_rows):
        # Static row sub-chunks; the last (possibly short) sub-chunk covers
        # exactly the valid rows, so partial tiles need no iota/where masking.
        lane = jnp.zeros((1, _LANE), jnp.float32)
        row0 = 0
        while row0 < valid_rows:
            rows = min(sub_rows, valid_rows - row0)
            x1v = x1_ref.at[:, row0:row0 + rows, :]
            x2v = x2_ref.at[:, row0:row0 + rows, :]
            dot, n1, n2 = _channel_sums(x1v, x2v, C, rows, unroll)
            # torch.nn.CosineSimilarity clamps each norm separately:
            #   cos = dot / (max(||x1||, eps) * max(||x2||, eps))
            # max(sqrt(n), eps) == sqrt(max(n, eps^2))  ->  one EUP rsqrt.
            denom_sq = jnp.maximum(n1, _EPS2) * jnp.maximum(n2, _EPS2)
            one_minus = 1.0 - dot * lax.rsqrt(denom_sq)
            lane = lane + jnp.sum(one_minus, axis=0, keepdims=True)
            row0 += rows
        out_ref[...] = out_ref[...] + lane

    if r_valid_last == r_tile:
        accumulate(r_tile)          # every tile is full: single fast path
    else:
        @pl.when(r != last_r)
        def _full_tiles():
            accumulate(r_tile)

        @pl.when(r == last_r)
        def _partial_tile():
            accumulate(r_valid_last)


def cosine_loss(feature_map1, feature_map2, *, target_tile_bytes=None):
    """(N, C, H, W) inputs -> scalar f32: mean(1 - cosine_sim(dim=1))."""
    assert feature_map1.shape == feature_map2.shape
    assert feature_map1.dtype == feature_map2.dtype
    N, C, H, W = feature_map1.shape
    HW = H * W
    HW_pad = ((HW + _LANE - 1) // _LANE) * _LANE

    x1 = feature_map1.reshape(N, C, HW)
    x2 = feature_map2.reshape(N, C, HW)
    if HW_pad != HW:
        # Zero-padded spatial positions give dot == 0 -> cos == 0 exactly,
        # i.e. each contributes exactly 1.0 to the sum; subtracted exactly
        # below. Keeps a single tiled/pipelined code path for every shape.
        pad = ((0, 0), (0, 0), (0, HW_pad - HW))
        x1 = jnp.pad(x1, pad)
        x2 = jnp.pad(x2, pad)
    r_total = HW_pad // _LANE
    # Free reshapes: channel axis leads each block (pure VPU reduction),
    # spatial positions become (rows, lanes).
    x1 = x1.reshape(N, C, r_total, _LANE)
    x2 = x2.reshape(N, C, r_total, _LANE)

    itemsize = jnp.dtype(feature_map1.dtype).itemsize
    phys_vmem = _vmem_phys_bytes()
    budget = (phys_vmem * 3) // 4               # headroom on every generation
    if target_tile_bytes is None:
        # 2 inputs x 2 pipeline buffers + slack must fit in the budget.
        target_tile_bytes = min(8 * 1024 * 1024, budget // 8)

    sublane_mult = 8 * max(1, 4 // itemsize)    # 8 f32 / 16 bf16 / 32 int8
    bytes_per_row = C * _LANE * itemsize
    max_rows = max(sublane_mult,
                   (target_tile_bytes // bytes_per_row)
                   // sublane_mult * sublane_mult)
    r_tile = r_total if r_total <= max_rows else max_rows
    num_r = pl.cdiv(r_total, r_tile)
    r_valid_last = r_total - (num_r - 1) * r_tile

    # TODO(synk): for very large C (>= ~2048 f32) even sublane-minimum tiles
    # push 2 inputs x 2 buffers past VMEM; add a third "arbitrary"
    # channel-tile grid axis for that regime.
    tile_bytes = C * r_tile * _LANE * itemsize
    vmem_limit = min(max(budget, 4 * tile_bytes + (4 << 20)),
                     (phys_vmem * 15) // 16)

    max_sub = 64 if C <= _UNROLL_ALL_C else 32
    sub_rows = _pick_sub_rows(r_tile, max_sub)

    kernel = functools.partial(
        _tiled_kernel, C=C, r_tile=r_tile, r_valid_last=r_valid_last,
        sub_rows=sub_rows, unroll=_CHANNEL_UNROLL)

    partials = pl.pallas_call(
        kernel,
        out_shape=jax.ShapeDtypeStruct((N, 1, _LANE), jnp.float32),
        grid_spec=pltpu.PrefetchScalarGridSpec(
            num_scalar_prefetch=0,
            grid=(N, num_r),
            in_specs=[
                pl.BlockSpec((pl.Squeezed(), C, r_tile, _LANE),
                             lambda n, r: (n, 0, r, 0)),
                pl.BlockSpec((pl.Squeezed(), C, r_tile, _LANE),
                             lambda n, r: (n, 0, r, 0)),
            ],
            out_specs=pl.BlockSpec((pl.Squeezed(), 1, _LANE),
                                   lambda n, r: (n, 0, 0)),
        ),
        compiler_params=pltpu.CompilerParams(
            # Per-sample output blocks -> the N axis shards across TensorCores
            # (v7x megacore); the row-tile axis accumulates into the resident
            # output block so it stays "arbitrary".
            # TODO(synk): when N == 1 on v7x, split the row-tile axis across
            # cores (per-row-tile partials) instead.
            dimension_semantics=("parallel", "arbitrary"),
            vmem_limit_bytes=int(vmem_limit),
        ),
    )(x1, x2)

    total = jnp.sum(partials)
    # Remove the exact +1.0 contribution of each zero-padded spatial position.
    total = total - jnp.float32(N * (HW_pad - HW))
    return total / jnp.float32(N * HW)


def cosine_loss_ref(fm1, fm2):
    # Pure-JAX reference mirroring torch.nn.CosineSimilarity(dim=1, eps=1e-6):
    # each norm is clamped at eps separately.
    n1 = jnp.maximum(jnp.sqrt(jnp.sum(fm1 * fm1, axis=1)), EPS)
    n2 = jnp.maximum(jnp.sqrt(jnp.sum(fm2 * fm2, axis=1)), EPS)
    cos = jnp.sum(fm1 * fm2, axis=1) / (n1 * n2)
    return jnp.mean(1.0 - cos)


if __name__ == "__main__":
    key = jax.random.PRNGKey(0)
    ks = jax.random.split(key, 10)

    # 1) Shape implied by the module's forward (NCHW feature maps).
    fm1 = jax.random.normal(ks[0], (2, 4, 16, 16), dtype=jnp.float32)
    fm2 = jax.random.normal(ks[1], (2, 4, 16, 16), dtype=jnp.float32)
    loss = jax.block_until_ready(cosine_loss(fm1, fm2))
    ref = cosine_loss_ref(fm1, fm2)
    assert jnp.allclose(loss, ref, atol=1e-5, rtol=1e-5), (loss, ref)

    # 2) Multi row-tile accumulation + statically-sized partial last tile
    #    (r_total = 12, r_tile forced to 8 -> last tile has 4 valid rows).
    g1 = jax.random.normal(ks[2], (2, 8, 24, 64), dtype=jnp.float32)
    g2 = jax.random.normal(ks[3], (2, 8, 24, 64), dtype=jnp.float32)
    loss2 = jax.block_until_ready(
        cosine_loss(g1, g2, target_tile_bytes=8 * 8 * _LANE * 4))
    ref2 = cosine_loss_ref(g1, g2)
    assert jnp.allclose(loss2, ref2, atol=1e-5, rtol=1e-5), (loss2, ref2)

    # 3) Spatial size not a multiple of 128 -> zero-pad + exact correction.
    h1 = jax.random.normal(ks[4], (2, 4, 10, 10), dtype=jnp.float32)
    h2 = jax.random.normal(ks[5], (2, 4, 10, 10), dtype=jnp.float32)
    loss3 = jax.block_until_ready(cosine_loss(h1, h2))
    ref3 = cosine_loss_ref(h1, h2)
    assert jnp.allclose(loss3, ref3, atol=1e-5, rtol=1e-5), (loss3, ref3)

    # 4) C > 32 -> lax.fori_loop(unroll=4) channel path.
    p1 = jax.random.normal(ks[6], (1, 48, 16, 16), dtype=jnp.float32)
    p2 = jax.random.normal(ks[7], (1, 48, 16, 16), dtype=jnp.float32)
    loss4 = jax.block_until_ready(cosine_loss(p1, p2))
    ref4 = cosine_loss_ref(p1, p2)
    assert jnp.allclose(loss4, ref4, atol=1e-5, rtol=1e-5), (loss4, ref4)

    # 5) bf16 inputs (per-slab cast to f32 inside the kernel).
    b1 = jax.random.normal(ks[8], (2, 4, 16, 16), dtype=jnp.bfloat16)
    b2 = jax.random.normal(ks[9], (2, 4, 16, 16), dtype=jnp.bfloat16)
    loss5 = jax.block_until_ready(cosine_loss(b1, b2))
    ref5 = cosine_loss_ref(b1.astype(jnp.float32), b2.astype(jnp.float32))
    assert jnp.allclose(loss5, ref5, atol=1e-4, rtol=1e-4), (loss5, ref5)

    print("KERNEL_OK")
</pallas_src>

<mosaic_0001>
module attributes {stable_mosaic.version = 11 : i64} {
  func.func @_tiled_kernel(%arg0: i32, %arg1: i32, %arg2: memref<1x4x2x128xf32, #tpu.memory_space<vmem>>, %arg3: memref<1x4x2x128xf32, #tpu.memory_space<vmem>>, %arg4: memref<1x1x128xf32, #tpu.memory_space<vmem>>) attributes {dimension_semantics = [#tpu.dimension_semantics<parallel>, #tpu.dimension_semantics<arbitrary>], iteration_bounds = array<i64: 2, 1>, scalar_prefetch = 0 : i64, scratch_operands = 0 : i64, tpu.core_type = #tpu.core_type<tc>, window_params = [{transform_indices = @transform_0, window_bounds = array<i64: 1, 4, 2, 128>}, {transform_indices = @transform_1, window_bounds = array<i64: 1, 4, 2, 128>}, {transform_indices = @transform_2, window_bounds = array<i64: 1, 1, 128>}]} {
    %c0_i32 = arith.constant 0 : i32
    %0 = arith.cmpi eq, %arg1, %c0_i32 : i32
    %1 = arith.extui %0 : i1 to i32
    %c0_i32_0 = arith.constant 0 : i32
    %2 = arith.cmpi ne, %1, %c0_i32_0 : i32
    scf.if %2 {
      %cst_64 = arith.constant 0.000000e+00 : f32
      %79 = vector.broadcast %cst_64 : f32 to vector<1x128xf32>
      %c0_65 = arith.constant 0 : index
      %c0_66 = arith.constant 0 : index
      %c0_67 = arith.constant 0 : index
      %80 = vector.load %arg4[%c0_65, %c0_66, %c0_67] : memref<1x1x128xf32, #tpu.memory_space<vmem>>, vector<1x1x128xf32>
      %81 = vector.shape_cast %80 : vector<1x1x128xf32> to vector<1x128xf32>
      %82 = vector.shape_cast %79 : vector<1x128xf32> to vector<1x1x128xf32>
      tpu.vector_store %arg4[%c0_65, %c0_66, %c0_67], %82 {strides = array<i32>} : memref<1x1x128xf32, #tpu.memory_space<vmem>>, vector<1x1x128xf32>,
    } else {
    }
    %cst = arith.constant 0.000000e+00 : f32
    %3 = vector.broadcast %cst : f32 to vector<1x128xf32>
    %cst_1 = arith.constant 0.000000e+00 : f32
    %4 = vector.broadcast %cst_1 : f32 to vector<2x128xf32>
    %c0_i32_2 = arith.constant 0 : i32
    %c0_i32_3 = arith.constant 0 : i32
    %c0_i32_4 = arith.constant 0 : i32
    %c0_i32_5 = arith.constant 0 : i32
    %5 = tpu.memref_slice %arg2[%c0_i32_2, %c0_i32_3, %c0_i32_4, %c0_i32_5] : memref<1x4x2x128xf32, #tpu.memory_space<vmem>> -> memref<1x4x2x128xf32, #tpu.memory_space<vmem>>
    %6 = tpu.memref_squeeze %5 : memref<1x4x2x128xf32, #tpu.memory_space<vmem>> -> memref<4x2x128xf32, #tpu.memory_space<vmem>>
    %c0 = arith.constant 0 : index
    %c0_6 = arith.constant 0 : index
    %c0_7 = arith.constant 0 : index
    %7 = vector.load %6[%c0, %c0_6, %c0_7] : memref<4x2x128xf32, #tpu.memory_space<vmem>>, vector<1x2x128xf32>
    %8 = vector.shape_cast %7 : vector<1x2x128xf32> to vector<2x128xf32>
    %c0_i32_8 = arith.constant 0 : i32
    %c0_i32_9 = arith.constant 0 : i32
    %c0_i32_10 = arith.constant 0 : i32
    %c0_i32_11 = arith.constant 0 : i32
    %9 = tpu.memref_slice %arg3[%c0_i32_8, %c0_i32_9, %c0_i32_10, %c0_i32_11] : memref<1x4x2x128xf32, #tpu.memory_space<vmem>> -> memref<1x4x2x128xf32, #tpu.memory_space<vmem>>
    %10 = tpu.memref_squeeze %9 : memref<1x4x2x128xf32, #tpu.memory_space<vmem>> -> memref<4x2x128xf32, #tpu.memory_space<vmem>>
    %c0_12 = arith.constant 0 : index
    %c0_13 = arith.constant 0 : index
    %c0_14 = arith.constant 0 : index
    %11 = vector.load %10[%c0_12, %c0_13, %c0_14] : memref<4x2x128xf32, #tpu.memory_space<vmem>>, vector<1x2x128xf32>
    %12 = vector.shape_cast %11 : vector<1x2x128xf32> to vector<2x128xf32>
    %13 = arith.mulf %8, %12 : vector<2x128xf32>
    %14 = arith.addf %4, %13 : vector<2x128xf32>
    %15 = arith.mulf %8, %8 : vector<2x128xf32>
    %16 = arith.addf %4, %15 : vector<2x128xf32>
    %17 = arith.mulf %12, %12 : vector<2x128xf32>
    %18 = arith.addf %4, %17 : vector<2x128xf32>
    %c0_i32_15 = arith.constant 0 : i32
    %c0_i32_16 = arith.constant 0 : i32
    %c0_i32_17 = arith.constant 0 : i32
    %c0_i32_18 = arith.constant 0 : i32
    %19 = tpu.memref_slice %arg2[%c0_i32_15, %c0_i32_16, %c0_i32_17, %c0_i32_18] : memref<1x4x2x128xf32, #tpu.memory_space<vmem>> -> memref<1x4x2x128xf32, #tpu.memory_space<vmem>>
    %20 = tpu.memref_squeeze %19 : memref<1x4x2x128xf32, #tpu.memory_space<vmem>> -> memref<4x2x128xf32, #tpu.memory_space<vmem>>
    %c1 = arith.constant 1 : index
    %c0_19 = arith.constant 0 : index
    %c0_20 = arith.constant 0 : index
    %21 = vector.load %20[%c1, %c0_19, %c0_20] : memref<4x2x128xf32, #tpu.memory_space<vmem>>, vector<1x2x128xf32>
    %22 = vector.shape_cast %21 : vector<1x2x128xf32> to vector<2x128xf32>
    %c0_i32_21 = arith.constant 0 : i32
    %c0_i32_22 = arith.constant 0 : i32
    %c0_i32_23 = arith.constant 0 : i32
    %c0_i32_24 = arith.constant 0 : i32
    %23 = tpu.memref_slice %arg3[%c0_i32_21, %c0_i32_22, %c0_i32_23, %c0_i32_24] : memref<1x4x2x128xf32, #tpu.memory_space<vmem>> -> memref<1x4x2x128xf32, #tpu.memory_space<vmem>>
    %24 = tpu.memref_squeeze %23 : memref<1x4x2x128xf32, #tpu.memory_space<vmem>> -> memref<4x2x128xf32, #tpu.memory_space<vmem>>
    %c1_25 = arith.constant 1 : index
    %c0_26 = arith.constant 0 : index
    %c0_27 = arith.constant 0 : index
    %25 = vector.load %24[%c1_25, %c0_26, %c0_27] : memref<4x2x128xf32, #tpu.memory_space<vmem>>, vector<1x2x128xf32>
    %26 = vector.shape_cast %25 : vector<1x2x128xf32> to vector<2x128xf32>
    %27 = arith.mulf %22, %26 : vector<2x128xf32>
    %28 = arith.addf %14, %27 : vector<2x128xf32>
    %29 = arith.mulf %22, %22 : vector<2x128xf32>
    %30 = arith.addf %16, %29 : vector<2x128xf32>
    %31 = arith.mulf %26, %26 : vector<2x128xf32>
    %32 = arith.addf %18, %31 : vector<2x128xf32>
    %c0_i32_28 = arith.constant 0 : i32
    %c0_i32_29 = arith.constant 0 : i32
    %c0_i32_30 = arith.constant 0 : i32
    %c0_i32_31 = arith.constant 0 : i32
    %33 = tpu.memref_slice %arg2[%c0_i32_28, %c0_i32_29, %c0_i32_30, %c0_i32_31] : memref<1x4x2x128xf32, #tpu.memory_space<vmem>> -> memref<1x4x2x128xf32, #tpu.memory_space<vmem>>
    %34 = tpu.memref_squeeze %33 : memref<1x4x2x128xf32, #tpu.memory_space<vmem>> -> memref<4x2x128xf32, #tpu.memory_space<vmem>>
    %c2 = arith.constant 2 : index
    %c0_32 = arith.constant 0 : index
    %c0_33 = arith.constant 0 : index
    %35 = vector.load %34[%c2, %c0_32, %c0_33] : memref<4x2x128xf32, #tpu.memory_space<vmem>>, vector<1x2x128xf32>
    %36 = vector.shape_cast %35 : vector<1x2x128xf32> to vector<2x128xf32>
    %c0_i32_34 = arith.constant 0 : i32
    %c0_i32_35 = arith.constant 0 : i32
    %c0_i32_36 = arith.constant 0 : i32
    %c0_i32_37 = arith.constant 0 : i32
    %37 = tpu.memref_slice %arg3[%c0_i32_34, %c0_i32_35, %c0_i32_36, %c0_i32_37] : memref<1x4x2x128xf32, #tpu.memory_space<vmem>> -> memref<1x4x2x128xf32, #tpu.memory_space<vmem>>
    %38 = tpu.memref_squeeze %37 : memref<1x4x2x128xf32, #tpu.memory_space<vmem>> -> memref<4x2x128xf32, #tpu.memory_space<vmem>>
    %c2_38 = arith.constant 2 : index
    %c0_39 = arith.constant 0 : index
    %c0_40 = arith.constant 0 : index
    %39 = vector.load %38[%c2_38, %c0_39, %c0_40] : memref<4x2x128xf32, #tpu.memory_space<vmem>>, vector<1x2x128xf32>
    %40 = vector.shape_cast %39 : vector<1x2x128xf32> to vector<2x128xf32>
    %41 = arith.mulf %36, %40 : vector<2x128xf32>
    %42 = arith.addf %28, %41 : vector<2x128xf32>
    %43 = arith.mulf %36, %36 : vector<2x128xf32>
    %44 = arith.addf %30, %43 : vector<2x128xf32>
    %45 = arith.mulf %40, %40 : vector<2x128xf32>
    %46 = arith.addf %32, %45 : vector<2x128xf32>
    %c0_i32_41 = arith.constant 0 : i32
    %c0_i32_42 = arith.constant 0 : i32
    %c0_i32_43 = arith.constant 0 : i32
    %c0_i32_44 = arith.constant 0 : i32
    %47 = tpu.memref_slice %arg2[%c0_i32_41, %c0_i32_42, %c0_i32_43, %c0_i32_44] : memref<1x4x2x128xf32, #tpu.memory_space<vmem>> -> memref<1x4x2x128xf32, #tpu.memory_space<vmem>>
    %48 = tpu.memref_squeeze %47 : memref<1x4x2x128xf32, #tpu.memory_space<vmem>> -> memref<4x2x128xf32, #tpu.memory_space<vmem>>
    %c3 = arith.constant 3 : index
    %c0_45 = arith.constant 0 : index
    %c0_46 = arith.constant 0 : index
    %49 = vector.load %48[%c3, %c0_45, %c0_46] : memref<4x2x128xf32, #tpu.memory_space<vmem>>, vector<1x2x128xf32>
    %50 = vector.shape_cast %49 : vector<1x2x128xf32> to vector<2x128xf32>
    %c0_i32_47 = arith.constant 0 : i32
    %c0_i32_48 = arith.constant 0 : i32
    %c0_i32_49 = arith.constant 0 : i32
    %c0_i32_50 = arith.constant 0 : i32
    %51 = tpu.memref_slice %arg3[%c0_i32_47, %c0_i32_48, %c0_i32_49, %c0_i32_50] : memref<1x4x2x128xf32, #tpu.memory_space<vmem>> -> memref<1x4x2x128xf32, #tpu.memory_space<vmem>>
    %52 = tpu.memref_squeeze %51 : memref<1x4x2x128xf32, #tpu.memory_space<vmem>> -> memref<4x2x128xf32, #tpu.memory_space<vmem>>
    %c3_51 = arith.constant 3 : index
    %c0_52 = arith.constant 0 : index
    %c0_53 = arith.constant 0 : index
    %53 = vector.load %52[%c3_51, %c0_52, %c0_53] : memref<4x2x128xf32, #tpu.memory_space<vmem>>, vector<1x2x128xf32>
    %54 = vector.shape_cast %53 : vector<1x2x128xf32> to vector<2x128xf32>
    %55 = arith.mulf %50, %54 : vector<2x128xf32>
    %56 = arith.addf %42, %55 : vector<2x128xf32>
    %57 = arith.mulf %50, %50 : vector<2x128xf32>
    %58 = arith.addf %44, %57 : vector<2x128xf32>
    %59 = arith.mulf %54, %54 : vector<2x128xf32>
    %60 = arith.addf %46, %59 : vector<2x128xf32>
    %cst_54 = arith.constant 9.99999996E-13 : f32
    %61 = vector.broadcast %cst_54 : f32 to vector<2x128xf32>
    %62 = arith.maximumf %58, %61 : vector<2x128xf32>
    %cst_55 = arith.constant 9.99999996E-13 : f32
    %63 = vector.broadcast %cst_55 : f32 to vector<2x128xf32>
    %64 = arith.maximumf %60, %63 : vector<2x128xf32>
    %65 = arith.mulf %62, %64 : vector<2x128xf32>
    %66 = math.rsqrt %65 : vector<2x128xf32>
    %67 = arith.mulf %56, %66 : vector<2x128xf32>
    %cst_56 = arith.constant 1.000000e+00 : f32
    %68 = vector.broadcast %cst_56 : f32 to vector<2x128xf32>
    %69 = arith.subf %68, %67 : vector<2x128xf32>
    %cst_57 = arith.constant dense<0.000000e+00> : vector<128xf32>
    %70 = vector.multi_reduction <add>, %69, %cst_57 [0] : vector<2x128xf32> to vector<128xf32>
    %71 = vector.shape_cast %70 : vector<128xf32> to vector<1x128xf32>
    %72 = arith.addf %3, %71 : vector<1x128xf32>
    %c0_58 = arith.constant 0 : index
    %c0_59 = arith.constant 0 : index
    %c0_60 = arith.constant 0 : index
    %73 = vector.load %arg4[%c0_58, %c0_59, %c0_60] : memref<1x1x128xf32, #tpu.memory_space<vmem>>, vector<1x1x128xf32>
    %74 = vector.shape_cast %73 : vector<1x1x128xf32> to vector<1x128xf32>
    %75 = arith.addf %74, %72 : vector<1x128xf32>
    %c0_61 = arith.constant 0 : index
    %c0_62 = arith.constant 0 : index
    %c0_63 = arith.constant 0 : index
    %76 = vector.load %arg4[%c0_61, %c0_62, %c0_63] : memref<1x1x128xf32, #tpu.memory_space<vmem>>, vector<1x1x128xf32>
    %77 = vector.shape_cast %76 : vector<1x1x128xf32> to vector<1x128xf32>
    %78 = vector.shape_cast %75 : vector<1x128xf32> to vector<1x1x128xf32>
    tpu.vector_store %arg4[%c0_61, %c0_62, %c0_63], %78 {strides = array<i32>} : memref<1x1x128xf32, #tpu.memory_space<vmem>>, vector<1x1x128xf32>,
    return
  }
  func.func @transform_0(%arg0: i32, %arg1: i32) -> (i32, i32, i32, i32) {
    %c0_i32 = arith.constant 0 : i32
    %c0_i32_0 = arith.constant 0 : i32
    %c0_i32_1 = arith.constant 0 : i32
    return %arg0, %c0_i32, %arg1, %c0_i32_0 : i32, i32, i32, i32
  }
  func.func @transform_1(%arg0: i32, %arg1: i32) -> (i32, i32, i32, i32) {
    %c0_i32 = arith.constant 0 : i32
    %c0_i32_0 = arith.constant 0 : i32
    %c0_i32_1 = arith.constant 0 : i32
    return %arg0, %c0_i32, %arg1, %c0_i32_0 : i32, i32, i32, i32
  }
  func.func @transform_2(%arg0: i32, %arg1: i32) -> (i32, i32, i32) {
    %c0_i32 = arith.constant 0 : i32
    %c0_i32_0 = arith.constant 0 : i32
    %c0_i32_1 = arith.constant 0 : i32
    return %arg0, %c0_i32, %c0_i32_0 : i32, i32, i32
  }
}

</mosaic_0001>

<llo_original>
// kernel: tpu_custom_call.1
$region0: #{tpu_custom_call.1}
  #allocation0 [shape = 'u32[]', space=smem, size = 0x4, offset = 0x4, fixed_abs, tag = 'smem constant byte address 0x4 - core index']
  #allocation1 [shape = 'u32[72,128]{1,0:T(1,128)}', space=vmem, size = 0x9000, scoped, tag = 'internal scratch']
  %s0 = inlined_call_operand.hbm [shape: f32[2,4,2,128], index: 0, kind: input, shape index: {}]
  %s1 = inlined_call_operand.hbm [shape: f32[2,4,2,128], index: 1, kind: input, shape index: {}]
  %s2 = inlined_call_operand.hbm [shape: f32[2,1,128], index: 2, kind: output, shape index: {}]
  %s3 = sld [smem:[#allocation0]]
  $region53: #{tpu_custom_call.1} parent=0
    _
  %s5 = ssub.s32 1, %s3
  %s6 = scalar_select 0, %s5, %s3
  $region1: #{tpu_custom_call.1} parent=0
    #allocation2 [shape = 'u8[8192]{0}', space=vmem, size = 0x2000, scoped, tag = 'input window, operand 0']
    #allocation3 [shape = 's32[2]{0}', space=sflag, size = 0x8, scoped, tag = 'scoped memory for tpu_custom_call.1']
    #allocation4 [shape = 's32[2]{0}', space=sflag, size = 0x8, scoped, tag = 'scoped memory for tpu_custom_call.1']
    #allocation5 [shape = 'u8[8192]{0}', space=vmem, size = 0x2000, scoped, tag = 'input window, operand 1']
    #allocation6 [shape = 's32[2]{0}', space=sflag, size = 0x8, scoped, tag = 'scoped memory for tpu_custom_call.1']
    #allocation7 [shape = 'u8[1024]{0}', space=vmem, size = 0x400, scoped, tag = 'output window, operand 0']
    %7 = vsyncpa [#allocation3], 0
    %s8 = scalar_lea.sflag [#allocation3], 1
    %9 = vsyncpa %s8, 0
    %10 = vsyncpa [#allocation6], 0
    %s11 = scalar_lea.sflag [#allocation6], 1
    %12 = vsyncpa %s11, 0
    %13 = vsyncpa [#allocation4], 0
    %s14 = scalar_lea.sflag [#allocation4], 1
    %15 = vsyncpa %s14, 0
    loop: start=0, step=1, limit=4
    $region2: #{tpu_custom_call.1} parent=1 // loop_pre_header
      _
    $region3: #{tpu_custom_call.1} parent=1 // loop_header
      %s17 = sphi 0, %s21
      %p18 = scmp.ge.s32.totalorder %s17, 4
      %s24 = sphi 0, %s36
      %s25 = sphi 0, %s32
      %s26 = sphi 0, %s24
      %s27 = sphi 0, %s25
      %s28 = sphi 0, %s26
      %s29 = sphi 0, %s27
      %s41 = sphi 0, %s43
      %s44 = sphi 0, %s41
      %s45 = sphi 0, %s44
      %s61 = sphi 0, %s45
      %s69 = sphi 0, %s71
      %s72 = sphi 0, %s69
      %s73 = sphi 0, %s72
      %s89 = sphi 0, %s73
      %s95 = sphi 0, %s97
      %s98 = sphi 0, %s95
      %s99 = sphi 0, %s98
      %s115 = sphi 0, %s99
    $region4: #{tpu_custom_call.1} parent=1 // loop_header_branch
      %20 = sbr.rel (%p18) target = $region8
    $region5: #{tpu_custom_call.1} parent=1 // loop_body
      %s22 = ssub.s32 %s17, 1
      %s23 = ssub.s32 %s17, 2
      %s30 = sadd.s32 1, %s25
      %p31 = scmp.ge.s32.totalorder %s30, 1
      %s32 = scalar_select %p31, 0, %s30
      %s33 = sadd.s32 1, %s24
      %s34 = scalar_select %p31, %s33, %s24
      %p35 = scmp.ge.s32.totalorder %s34, 2
      %s36 = scalar_select %p35, 0, %s34
      %s37 = ssub.s32 %s24, %s36
      %s38 = ssub.s32 %s25, %s32
      %s39 = sor.u32 %s37, %s38
      %p40 = scmp.eq.s32.totalorder %s39, 0
      %s42 = sadd.s32 %s41, 1
      %s43 = scalar_select %p40, %s41, %s42
      %p46 = pneg %p40
      %p47 = scmp.eq.s32.totalorder %s17, 1
      %p48 = por %p46, %p47
      %p49 = scmp.ne.s32.totalorder %s41, %s44
      %p50 = scmp.eq.s32.totalorder %s17, 0
      %p51 = por %p49, %p50
      %p52 = scmp.ne.s32.totalorder %s41, %s44
      %p53 = scmp.eq.s32.totalorder %s22, 1
      %p54 = por %p52, %p53
      %p55 = scmp.ne.s32.totalorder %s44, %s45
      %p56 = scmp.eq.s32.totalorder %s22, 0
      %p57 = por %p55, %p56
      %p58 = scmp.ne.s32.totalorder %s44, %s45
      %p59 = scmp.eq.s32.totalorder %s23, 1
      %p60 = por %p58, %p59
      %p62 = scmp.ne.s32.totalorder %s45, %s61
      %p63 = scmp.eq.s32.totalorder %s23, 0
      %p64 = por %p62, %p63
      %s65 = ssub.s32 %s24, %s36
      %s66 = ssub.s32 %s25, %s32
      %s67 = sor.u32 %s65, %s66
      %p68 = scmp.eq.s32.totalorder %s67, 0
      %s70 = sadd.s32 %s69, 1
      %s71 = scalar_select %p68, %s69, %s70
      %p74 = pneg %p68
      %p75 = scmp.eq.s32.totalorder %s17, 1
      %p76 = por %p74, %p75
      %p77 = scmp.ne.s32.totalorder %s69, %s72
      %p78 = scmp.eq.s32.totalorder %s17, 0
      %p79 = por %p77, %p78
      %p80 = scmp.ne.s32.totalorder %s69, %s72
      %p81 = scmp.eq.s32.totalorder %s22, 1
      %p82 = por %p80, %p81
      %p83 = scmp.ne.s32.totalorder %s72, %s73
      %p84 = scmp.eq.s32.totalorder %s22, 0
      %p85 = por %p83, %p84
      %p86 = scmp.ne.s32.totalorder %s72, %s73
      %p87 = scmp.eq.s32.totalorder %s23, 1
      %p88 = por %p86, %p87
      %p90 = scmp.ne.s32.totalorder %s73, %s89
      %p91 = scmp.eq.s32.totalorder %s23, 0
      %p92 = por %p90, %p91
      %s93 = ssub.s32 %s24, %s36
      %p94 = scmp.eq.s32.totalorder %s93, 0
      %s96 = sadd.s32 %s95, 1
      %s97 = scalar_select %p94, %s95, %s96
      %p100 = pneg %p94
      %p101 = scmp.eq.s32.totalorder %s17, 1
      %p102 = por %p100, %p101
      %p103 = scmp.ne.s32.totalorder %s95, %s98
      %p104 = scmp.eq.s32.totalorder %s17, 0
      %p105 = por %p103, %p104
      %p106 = scmp.ne.s32.totalorder %s95, %s98
      %p107 = scmp.eq.s32.totalorder %s22, 1
      %p108 = por %p106, %p107
      %p109 = scmp.ne.s32.totalorder %s98, %s99
      %p110 = scmp.eq.s32.totalorder %s22, 0
      %p111 = por %p109, %p110
      %p112 = scmp.ne.s32.totalorder %s98, %s99
      %p113 = scmp.eq.s32.totalorder %s23, 1
      %p114 = por %p112, %p113
      %p116 = scmp.ne.s32.totalorder %s99, %s115
      %p117 = scmp.eq.s32.totalorder %s23, 0
      %p118 = por %p116, %p117
      %p119 = scmp.le.s32.totalorder 1, %s17
      %p120 = scmp.lt.s32.totalorder %s17, 3
      %p121 = pnand %p119, %p120
      %p122 = pneg %p121
      // Predicated region
      $region9: #{tpu_custom_call.1} parent=5 // pred_check
        _
      $region10: #{tpu_custom_call.1} parent=5 // pred_check_branch
        %124 = sbr.rel (%p121) target = $region12
      $region11: #{tpu_custom_call.1} parent=5 // pred_region
        %s125 = ssub.s32 %s17, 1
      $region12: #{tpu_custom_call.1} parent=5 // pred_fallthru
        _
      %p126 = scmp.lt.s32.totalorder %s17, 2
      // Predicated region
      $region13: #{tpu_custom_call.1} parent=5 // pred_check
        %p127 = pneg %p126
      $region14: #{tpu_custom_call.1} parent=5 // pred_check_branch
        %129 = sbr.rel (%p127) target = $region16
      $region15: #{tpu_custom_call.1} parent=5 // pred_region
        // Predicated region
        $region17: #{tpu_custom_call.1} parent=15 // pred_check
          %p130 = pneg %p51
        $region18: #{tpu_custom_call.1} parent=15 // pred_check_branch
          %132 = sbr.rel (%p130) target = $region20
        $region19: #{tpu_custom_call.1} parent=15 // pred_region
          %s133 = sand.u32 %s41, 1
          %s134 = scalar_lea.sflag [#allocation3], %s133
          %s135 = sand.u32 %s41, 1
          %s136 = smul.addr %s135, 8
          %s137 = scalar_lea.vmem [#allocation2], %s136
          %139 = vsyncadd %s134, 0
          %s140 = smul.addr %s24, 4
          %s141 = sadd.s32 %s25, %s140
          %s142 = smul.addr %s141, 2
          %s143 = scalar_lea.hbm %s0, %s142
          %s144 = sshll.u32 %s143, 4
          %s145 = int_to_ptr.hbm [resolvable:$true] %s144
          %s146 = sshll.u32 %s137, 4
          %s147 = int_to_ptr.vmem [resolvable:$true] %s146
          %152 = dma.hbm_to_vmem [thread:$0]  %s145, 128, %s147, %s134, 32, 32, 2
        $region20: #{tpu_custom_call.1} parent=15 // pred_fallthru
          _
        // Predicated region
        $region21: #{tpu_custom_call.1} parent=15 // pred_check
          %p153 = pneg %p79
        $region22: #{tpu_custom_call.1} parent=15 // pred_check_branch
          %155 = sbr.rel (%p153) target = $region24
        $region23: #{tpu_custom_call.1} parent=15 // pred_region
          %s156 = sand.u32 %s69, 1
          %s157 = scalar_lea.sflag [#allocation6], %s156
          %s158 = sand.u32 %s69, 1
          %s159 = smul.addr %s158, 8
          %s160 = scalar_lea.vmem [#allocation5], %s159
          %162 = vsyncadd %s157, 0
          %s163 = smul.addr %s24, 4
          %s164 = sadd.s32 %s25, %s163
          %s165 = smul.addr %s164, 2
          %s166 = scalar_lea.hbm %s1, %s165
          %s167 = sshll.u32 %s166, 4
          %s168 = int_to_ptr.hbm [resolvable:$true] %s167
          %s169 = sshll.u32 %s160, 4
          %s170 = int_to_ptr.vmem [resolvable:$true] %s169
          %175 = dma.hbm_to_vmem [thread:$0]  %s168, 128, %s170, %s157, 32, 32, 2
        $region24: #{tpu_custom_call.1} parent=15 // pred_fallthru
          _
      $region16: #{tpu_custom_call.1} parent=5 // pred_fallthru
        _
      %p176 = scmp.le.s32.totalorder 1, %s17
      %p177 = scmp.lt.s32.totalorder %s17, 3
      %p178 = pnand %p176, %p177
      %p179 = pneg %p178
      // Predicated region
      $region25: #{tpu_custom_call.1} parent=5 // pred_check
        _
      $region26: #{tpu_custom_call.1} parent=5 // pred_check_branch
        %181 = sbr.rel (%p178) target = $region28
      $region27: #{tpu_custom_call.1} parent=5 // pred_region
        %s182 = ssub.s32 %s17, 1
        %s183 = sand.u32 %s44, 1
        %s184 = scalar_lea.sflag [#allocation3], %s183
        %s185 = sand.u32 %s44, 1
        %s186 = smul.addr %s185, 8
        %s187 = scalar_lea.vmem [#allocation2], %s186
        // Predicated region
        $region29: #{tpu_custom_call.1} parent=27 // pred_check
          %p188 = pneg %p57
        $region30: #{tpu_custom_call.1} parent=27 // pred_check_branch
          %190 = sbr.rel (%p188) target = $region32
        $region31: #{tpu_custom_call.1} parent=27 // pred_region
          %192 = dma.done %s184, 128
        $region32: #{tpu_custom_call.1} parent=27 // pred_fallthru
          _
        %s193 = sand.u32 %s72, 1
        %s194 = scalar_lea.sflag [#allocation6], %s193
        %s195 = sand.u32 %s72, 1
        %s196 = smul.addr %s195, 8
        %s197 = scalar_lea.vmem [#allocation5], %s196
        // Predicated region
        $region33: #{tpu_custom_call.1} parent=27 // pred_check
          %p198 = pneg %p85
        $region34: #{tpu_custom_call.1} parent=27 // pred_check_branch
          %200 = sbr.rel (%p198) target = $region36
        $region35: #{tpu_custom_call.1} parent=27 // pred_region
          %202 = dma.done %s194, 128
        $region36: #{tpu_custom_call.1} parent=27 // pred_fallthru
          _
        %s203 = sand.u32 %s44, 1
        %s204 = scalar_lea.sflag [#allocation3], %s203
        %s205 = sand.u32 %s44, 1
        %s206 = smul.addr %s205, 8
        %s207 = scalar_lea.vmem [#allocation2], %s206
        %p208 = pneg %p57
        %p209 = pneg %p54
        %s210 = sand.u32 %s72, 1
        %s211 = scalar_lea.sflag [#allocation6], %s210
        %s212 = sand.u32 %s72, 1
        %s213 = smul.addr %s212, 8
        %s214 = scalar_lea.vmem [#allocation5], %s213
        %p215 = pneg %p85
        %p216 = pneg %p82
        %p217 = pneg %p111
        %p218 = pneg %p108
        %s219 = sand.u32 %s98, 1
        %s220 = scalar_lea.sflag [#allocation4], %s219
        %s221 = sand.u32 %s98, 1
        %s222 = scalar_lea.vmem [#allocation7], %s221
        %p223 = scmp.eq.s32.totalorder %s27, 0
        // Predicated region
        $region37: #{tpu_custom_call.1} parent=27 // pred_check
          %p224 = pneg %p223
        $region38: #{tpu_custom_call.1} parent=27 // pred_check_branch
          %226 = sbr.rel (%p224) target = $region40
        $region39: #{tpu_custom_call.1} parent=27 // pred_region
          %227 = vst [vmem:[%s222] sm:$0x1] 0.0
        $region40: #{tpu_custom_call.1} parent=27 // pred_fallthru
          _
        %v228 = vld [vmem:[%s187] sm:$0x3]
        %v229 = vld [vmem:[%s197] sm:$0x3]
        %v230 = vmul.f32 %v228, %v229
        %v231 = vadd.f32 %v230, 0.0
        %v232 = vmul.f32 %v228, %v228
        %v233 = vadd.f32 %v232, 0.0
        %v234 = vmul.f32 %v229, %v229
        %v235 = vadd.f32 %v234, 0.0
        %s236 = scalar_lea.vmem %s187, 2 [#allocation2]
        %v237 = vld [vmem:[%s236] sm:$0x3]
        %s238 = scalar_lea.vmem %s197, 2 [#allocation5]
        %v239 = vld [vmem:[%s238] sm:$0x3]
        %v240 = vmul.f32 %v237, %v239
        %v241 = vadd.f32 %v231, %v240
        %v242 = vmul.f32 %v237, %v237
        %v243 = vadd.f32 %v233, %v242
        %v244 = vmul.f32 %v239, %v239
        %v245 = vadd.f32 %v235, %v244
        %s246 = scalar_lea.vmem %s187, 4 [#allocation2]
        %v247 = vld [vmem:[%s246] sm:$0x3]
        %s248 = scalar_lea.vmem %s197, 4 [#allocation5]
        %v249 = vld [vmem:[%s248] sm:$0x3]
        %v250 = vmul.f32 %v247, %v249
        %v251 = vadd.f32 %v241, %v250
        %v252 = vmul.f32 %v247, %v247
        %v253 = vadd.f32 %v243, %v252
        %v254 = vmul.f32 %v249, %v249
        %v255 = vadd.f32 %v245, %v254
        %s256 = scalar_lea.vmem %s187, 6 [#allocation2]
        %v257 = vld [vmem:[%s256] sm:$0x3]
        %s258 = scalar_lea.vmem %s197, 6 [#allocation5]
        %v259 = vld [vmem:[%s258] sm:$0x3]
        %v260 = vmul.f32 %v257, %v259
        %v261 = vadd.f32 %v251, %v260
        %v262 = vmul.f32 %v257, %v257
        %v263 = vadd.f32 %v253, %v262
        %v264 = vmul.f32 %v259, %v259
        %v265 = vadd.f32 %v255, %v264
        %v266 = vmax.f32 %v263, 1e-12
        %v267 = vmax.f32 %v265, 1e-12
        %v268 = vmul.f32 %v266, %v267
        %v269 = vrsqrt.pop %v268
        %v270 = vmul.f32 %v269, %v268
        %v271 = vmul.f32 %v270, %v269
        %v272 = vmul.f32 0.5, %v271
        %v273 = vsub.f32 1.5, %v272
        %v274 = vmul.f32 %v269, %v273
        %vm275 = vweird.f32 %v268
        %vm276 = vweird.f32 %v269
        %vm277 = vmor %vm275, %vm276
        %v278 = vsel %vm277, %v269, %v274
        %v279 = vmul.f32 %v261, %v278
        %v280 = vsub.f32 1.0, %v279
        %vm281 = vcmask 1041408
        %v282 = vsel %vm281, %v280, 0.0
        %v283 = vrot.slane %v282, 4
        %v284 = vadd.f32 %v282, %v283
        %v285 = vrot.slane %v284, 2
        %v286 = vadd.f32 %v284, %v285
        %v287 = vrot.slane %v286, 1
        %v288 = vadd.f32 %v286, %v287
        %v289 = vadd.f32 %v288, 0.0
        %v290 = vld [vmem:[%s222] sm:$0x1]
        %v291 = vadd.f32 %v290, %v289
        %292 = vst [vmem:[%s222] sm:$0x1] %v291
        %s293 = sand.u32 %s98, 1
        %s294 = scalar_lea.sflag [#allocation4], %s293
        %s295 = sand.u32 %s98, 1
        %s296 = scalar_lea.vmem [#allocation7], %s295
        // Predicated region
        $region41: #{tpu_custom_call.1} parent=27 // pred_check
          %p297 = pneg %p108
        $region42: #{tpu_custom_call.1} parent=27 // pred_check_branch
          %299 = sbr.rel (%p297) target = $region44
        $region43: #{tpu_custom_call.1} parent=27 // pred_region
          %301 = vsyncadd %s294, 0
          %s302 = scalar_lea.hbm %s2, %s26
          %s304 = sshll.u32 %s296, 4
          %s305 = int_to_ptr.vmem [resolvable:$true] %s304
          %s306 = sshll.u32 %s302, 4
          %s307 = int_to_ptr.hbm [resolvable:$true] %s306
          %309 = dma.vmem_to_hbm [thread:$0]  %s305, 16, %s307, %s294
        $region44: #{tpu_custom_call.1} parent=27 // pred_fallthru
          _
      $region28: #{tpu_custom_call.1} parent=5 // pred_fallthru
        _
      %p310 = scmp.le.s32.totalorder 2, %s17
      // Predicated region
      $region45: #{tpu_custom_call.1} parent=5 // pred_check
        %p311 = pneg %p310
      $region46: #{tpu_custom_call.1} parent=5 // pred_check_branch
        %313 = sbr.rel (%p311) target = $region48
      $region47: #{tpu_custom_call.1} parent=5 // pred_region
        %s314 = ssub.s32 %s17, 2
        // Predicated region
        $region49: #{tpu_custom_call.1} parent=47 // pred_check
          %p315 = pneg %p114
        $region50: #{tpu_custom_call.1} parent=47 // pred_check_branch
          %317 = sbr.rel (%p315) target = $region52
        $region51: #{tpu_custom_call.1} parent=47 // pred_region
          %s318 = sand.u32 %s99, 1
          %s319 = scalar_lea.sflag [#allocation4], %s318
          %s320 = sand.u32 %s99, 1
          %s321 = scalar_lea.vmem [#allocation7], %s320
          %323 = dma.done %s319, 16
        $region52: #{tpu_custom_call.1} parent=47 // pred_fallthru
          _
      $region48: #{tpu_custom_call.1} parent=5 // pred_fallthru
        _
    $region6: #{tpu_custom_call.1} parent=1 // loop_footer
      %s21 = sadd.s32 1, %s17
    $region7: #{tpu_custom_call.1} parent=1 // loop_footer_branch
      %16 = sbr.rel target = $region3
    $region8: #{tpu_custom_call.1} parent=1 // loop_exit
      _
    %324 = vsyncpa [#allocation3], 1
    %s325 = scalar_lea.sflag [#allocation3], 1
    %326 = vsyncpa %s325, 1
    %327 = vsyncpa [#allocation6], 1
    %s328 = scalar_lea.sflag [#allocation6], 1
    %329 = vsyncpa %s328, 1
    %330 = vsyncpa [#allocation4], 1
    %s331 = scalar_lea.sflag [#allocation4], 1
    %332 = vsyncpa %s331, 1

</llo_original>
